<compile_context>
chip_gen: v5e
topology: v5e:2x2
jax: 0.10.0
libtpu: 0.0.40
codegen_flags: <defaults>
</compile_context>

<pallas_src>
import math

import jax
import jax.numpy as jnp
from jax.experimental import pallas as pl
from jax.experimental.pallas import tpu as pltpu


_VMEM_BUDGET_BYTES = 48 * 1024 * 1024   # headroom under v7x's 64 MiB/TC VMEM


def _vmem_bytes(L, h, d_k, tq):
    in_b, out_b = 2, 4                            # bf16 q/k, f32 outputs
    k_res    = h * L * d_k * in_b                 # K resident across q tiles
    q_blk    = 2 * h * tq * d_k * in_b            # double-buffered Q
    aw_blk   = 2 * h * d_k * 4
    mask_blk = 2 * L * 4
    asc_blk  = 2 * h * L * out_b
    attn_blk = 2 * h * tq * L * out_b             # dominant term
    asp_tmp  = h * L * d_k * 4                    # f32 temp for the aspect reduce
    return k_res + q_blk + aw_blk + mask_blk + asc_blk + attn_blk + asp_tmp


def _choose_qtile(L, h, d_k):
    """Largest sublane-friendly q tile that divides L and fits the VMEM budget."""
    for tq in (1024, 512, 256, 128, 64, 32, 16, 8):
        if L % tq == 0 and _vmem_bytes(L, h, d_k, tq) <= _VMEM_BUDGET_BYTES:
            return tq
    return L   # tiny / awkward L (e.g. unit test): whole query axis in one tile


def _mha_attention_kernel(aw_ref, q_ref, k_ref, maskadd_ref, bias_ref,
                          asc_ref, attn_ref):
    # aw_ref:      (1, h, 1, d_k) f32   aspect @ weight_m (hoisted to XLA)
    # q_ref:       (1, h, tq, d_k) bf16 pre-scaled by 1/sqrt(d_k)
    # k_ref:       (1, h, L, d_k) bf16  resident across the q-tile grid axis
    # maskadd_ref: (1, 1, L) f32        additive key-padding mask (0 / -1e9)
    # bias_ref:    (1,) f32 in SMEM     bias_m
    # asc_ref:     (1, 1, h, L) f32     aspect-score row (written at qt == 0)
    # attn_ref:    (1, h, tq, L) f32    softmax(QK^T/sqrt(d_k) + mask)
    q = q_ref[0]                       # (h, tq, d_k)
    k = k_ref[0]                       # (h, L, d_k)
    madd = maskadd_ref[0]              # (1, L)

    # ---- aspect path (rank-1 in the query axis): compute once per batch ----
    @pl.when(pl.program_id(1) == 0)
    def _():
        aw = aw_ref[0]                                          # (h, 1, d_k) f32
        # VPU broadcast-multiply + lane reduce (no M=1 MXU matmul).
        a_row = jnp.sum(aw * k.astype(jnp.float32), axis=-1)    # (h, L)
        asc_ref[0, 0] = jnp.tanh(a_row + bias_ref[0])

    # ---- self-attention: bf16 MXU matmul, f32 accumulation, masked softmax --
    scores = jnp.einsum("hqd,hkd->hqk", q, k,
                        preferred_element_type=jnp.float32)     # (h, tq, L) f32
    scores = scores + madd[None, :, :]                          # additive mask
    m = jnp.max(scores, axis=-1, keepdims=True)
    e = jnp.exp(scores - m)
    denom = jnp.sum(e, axis=-1, keepdims=True)
    attn = e * pl.reciprocal(denom, approx=True)                # EUP vrcp
    attn_ref[0] = attn.astype(attn_ref.dtype)


def multi_head_attention_pallas(params, query, key, mask, aspect, h):
    """Forward pass of MultiHeadAttention.forward (opt.fusion=False, eval mode)."""
    B, L, d_model = query.shape
    d_k = d_model // h

    # ---- XLA glue: projections, head split, hoisted aspect matvec ----------
    q = (query @ params["wq"] + params["bq"]) * (1.0 / math.sqrt(d_k))
    k = key @ params["wk"] + params["bk"]
    q = q.reshape(B, L, h, d_k).transpose(0, 2, 1, 3).astype(jnp.bfloat16)
    k = k.reshape(B, L, h, d_k).transpose(0, 2, 1, 3).astype(jnp.bfloat16)

    asp = aspect @ params["wd"] + params["bd"]                       # (B, 1, d_k)
    # aw[b, h, 0, :] = asp[b, 0, :] @ weight_m[h]   (M=1 matvec, cheap in XLA)
    aw = jnp.einsum("bxd,hde->bhxe", asp, params["weight_m"]
                    ).astype(jnp.float32)                            # (B, h, 1, d_k)

    mask = mask[:, :, :L]
    maskadd = jnp.where(mask == 0, jnp.float32(-1.0e9),
                        jnp.float32(0.0))                            # (B, 1, L)
    bias_m = params["bias_m"].astype(jnp.float32)                    # (1,) SMEM

    tq = _choose_qtile(L, h, d_k)
    n_qt = L // tq
    vmem_limit = int(min(max(2 * _vmem_bytes(L, h, d_k, tq), 32 * 1024 * 1024),
                         64 * 1024 * 1024))

    out_shape = (jax.ShapeDtypeStruct((B, n_qt, h, L), jnp.float32),  # aspect rows
                 jax.ShapeDtypeStruct((B, h, L, L), jnp.float32))     # self_attn

    asc_rows, attn = pl.pallas_call(
        _mha_attention_kernel,
        out_shape=out_shape,
        grid_spec=pltpu.PrefetchScalarGridSpec(
            num_scalar_prefetch=0,
            grid=(B, n_qt),
            in_specs=[
                pl.BlockSpec((1, h, 1, d_k),  lambda b, qt: (b, 0, 0, 0)),   # aw
                pl.BlockSpec((1, h, tq, d_k), lambda b, qt: (b, 0, qt, 0)),  # q
                pl.BlockSpec((1, h, L, d_k),  lambda b, qt: (b, 0, 0, 0)),   # k (resident)
                pl.BlockSpec((1, 1, L),       lambda b, qt: (b, 0, 0)),      # mask
                pl.BlockSpec(memory_space=pltpu.MemorySpace.SMEM),           # bias_m
            ],
            out_specs=[
                pl.BlockSpec((1, 1, h, L),  lambda b, qt: (b, qt, 0, 0)),    # asc row
                pl.BlockSpec((1, h, tq, L), lambda b, qt: (b, 0, qt, 0)),    # attn
            ],
        ),
        compiler_params=pltpu.CompilerParams(
            dimension_semantics=("parallel", "parallel"),
            vmem_limit_bytes=vmem_limit),
    )(aw, q, k, maskadd, bias_m)

    # Only the qt == 0 slot is meaningful; the row is identical for every query
    # position, so broadcast back to the PyTorch (B, h, L, L) contract (lazy;
    # downstream should keep the row form to avoid materializing it).
    asc = jnp.broadcast_to(asc_rows[:, 0, :, None, :], (B, h, L, L))
    return asc, attn


def multi_head_attention_ref(params, query, key, mask, aspect, h):
    """Pure-JAX f32 reference mirroring the PyTorch forward (fusion=False, eval)."""
    B, L, d_model = query.shape
    d_k = d_model // h
    q = (query @ params["wq"] + params["bq"]).reshape(B, L, h, d_k).transpose(0, 2, 1, 3)
    k = (key @ params["wk"] + params["bk"]).reshape(B, L, h, d_k).transpose(0, 2, 1, 3)
    asp = aspect @ params["wd"] + params["bd"]                   # (B, 1, d_k)
    asp = jnp.broadcast_to(asp[:, None, :, :], (B, h, L, d_k))
    wm = jnp.broadcast_to(params["weight_m"][None], (B, h, d_k, d_k))
    a1 = jnp.einsum("bhld,bhde->bhle", asp, wm)
    a_sc = jnp.einsum("bhle,bhme->bhlm", a1, k)
    asps = jnp.tanh(a_sc + params["bias_m"][0])
    scores = jnp.einsum("bhld,bhmd->bhlm", q, k) / math.sqrt(d_k)
    mask4 = mask[:, :, :L].astype(jnp.int32)[:, None, :, :]      # (B, 1, 1, L)
    scores = jnp.where(mask4 == 0, -1000000000.0, scores)
    attn = jax.nn.softmax(scores, axis=-1)
    return asps, attn


if __name__ == "__main__":
    B, L, h, d_model = 2, 8, 4, 32
    d_k = d_model // h

    key0 = jax.random.PRNGKey(0)
    ks = jax.random.split(key0, 10)

    params = {
        "wq": jax.random.normal(ks[0], (d_model, d_model), jnp.float32) * 0.1,
        "bq": jax.random.normal(ks[1], (d_model,), jnp.float32) * 0.01,
        "wk": jax.random.normal(ks[2], (d_model, d_model), jnp.float32) * 0.1,
        "bk": jax.random.normal(ks[3], (d_model,), jnp.float32) * 0.01,
        "wd": jax.random.normal(ks[4], (d_model, d_k), jnp.float32) * 0.1,
        "bd": jax.random.normal(ks[5], (d_k,), jnp.float32) * 0.01,
        "weight_m": jax.random.normal(ks[6], (h, d_k, d_k), jnp.float32) * 0.1,
        "bias_m": jax.random.normal(ks[7], (1,), jnp.float32) * 0.01,
    }

    query = jax.random.normal(ks[8], (B, L, d_model), jnp.float32)
    key_in = query  # module is typically called with query == key (self-attention)
    aspect = jax.random.normal(ks[9], (B, 1, d_model), jnp.float32)

    # padding mask: (B, 1, L_src) with some zero (masked) positions; sliced to L inside.
    mask_full = jnp.ones((B, 1, 16), jnp.int32)
    mask_full = mask_full.at[1, 0, 6:].set(0)

    asc, attn = multi_head_attention_pallas(params, query, key_in, mask_full, aspect, h)
    jax.block_until_ready((asc, attn))

    asc_ref, attn_ref = multi_head_attention_ref(params, query, key_in, mask_full, aspect, h)
    # Tolerance loosened to absorb the bf16 q/k cast and the approx reciprocal.
    assert jnp.allclose(asc, asc_ref, atol=2e-2, rtol=2e-2), "aspect_scores mismatch"
    assert jnp.allclose(attn, attn_ref, atol=2e-2, rtol=2e-2), "attention mismatch"

    print("KERNEL_OK")
</pallas_src>

<mosaic_0001>
module attributes {stable_mosaic.version = 11 : i64} {
  func.func @_mha_attention_kernel(%arg0: i32, %arg1: i32, %arg2: memref<1x4x1x8xf32, #tpu.memory_space<vmem>>, %arg3: memref<1x4x8x8xbf16, #tpu.memory_space<vmem>>, %arg4: memref<1x4x8x8xbf16, #tpu.memory_space<vmem>>, %arg5: memref<1x1x8xf32, #tpu.memory_space<vmem>>, %arg6: memref<1xf32, #tpu.memory_space<smem>>, %arg7: memref<1x1x4x8xf32, #tpu.memory_space<vmem>>, %arg8: memref<1x4x8x8xf32, #tpu.memory_space<vmem>>) attributes {dimension_semantics = [#tpu.dimension_semantics<parallel>, #tpu.dimension_semantics<parallel>], iteration_bounds = array<i64: 2, 1>, scalar_prefetch = 0 : i64, scratch_operands = 0 : i64, tpu.core_type = #tpu.core_type<tc>, window_params = [{transform_indices = @transform_0, window_bounds = array<i64: 1, 4, 1, 8>}, {transform_indices = @transform_1, window_bounds = array<i64: 1, 4, 8, 8>}, {transform_indices = @transform_2, window_bounds = array<i64: 1, 4, 8, 8>}, {transform_indices = @transform_3, window_bounds = array<i64: 1, 1, 8>}, {transform_indices = @transform_4, window_bounds = array<i64: 1>}, {transform_indices = @transform_5, window_bounds = array<i64: 1, 1, 4, 8>}, {transform_indices = @transform_6, window_bounds = array<i64: 1, 4, 8, 8>}]} {
    %c0 = arith.constant 0 : index
    %c0_0 = arith.constant 0 : index
    %c0_1 = arith.constant 0 : index
    %c0_2 = arith.constant 0 : index
    %0 = vector.load %arg3[%c0, %c0_0, %c0_1, %c0_2] : memref<1x4x8x8xbf16, #tpu.memory_space<vmem>>, vector<1x4x8x8xbf16>
    %1 = vector.shape_cast %0 : vector<1x4x8x8xbf16> to vector<4x8x8xbf16>
    %c0_3 = arith.constant 0 : index
    %c0_4 = arith.constant 0 : index
    %c0_5 = arith.constant 0 : index
    %c0_6 = arith.constant 0 : index
    %2 = vector.load %arg4[%c0_3, %c0_4, %c0_5, %c0_6] : memref<1x4x8x8xbf16, #tpu.memory_space<vmem>>, vector<1x4x8x8xbf16>
    %3 = vector.shape_cast %2 : vector<1x4x8x8xbf16> to vector<4x8x8xbf16>
    %c0_7 = arith.constant 0 : index
    %c0_8 = arith.constant 0 : index
    %c0_9 = arith.constant 0 : index
    %4 = vector.load %arg5[%c0_7, %c0_8, %c0_9] : memref<1x1x8xf32, #tpu.memory_space<vmem>>, vector<1x1x8xf32>
    %5 = vector.shape_cast %4 : vector<1x1x8xf32> to vector<1x8xf32>
    %c0_i32 = arith.constant 0 : i32
    %6 = arith.cmpi eq, %arg1, %c0_i32 : i32
    %7 = arith.extui %6 : i1 to i32
    %c0_i32_10 = arith.constant 0 : i32
    %8 = arith.cmpi ne, %7, %c0_i32_10 : i32
    scf.if %8 {
      %c0_17 = arith.constant 0 : index
      %c0_18 = arith.constant 0 : index
      %c0_19 = arith.constant 0 : index
      %c0_20 = arith.constant 0 : index
      %26 = vector.load %arg2[%c0_17, %c0_18, %c0_19, %c0_20] : memref<1x4x1x8xf32, #tpu.memory_space<vmem>>, vector<1x4x1x8xf32>
      %27 = vector.shape_cast %26 : vector<1x4x1x8xf32> to vector<4x1x8xf32>
      %28 = arith.extf %3 : vector<4x8x8xbf16> to vector<4x8x8xf32>
      %29 = vector.broadcast %27 : vector<4x1x8xf32> to vector<4x8x8xf32>
      %30 = arith.mulf %29, %28 : vector<4x8x8xf32>
      %cst_21 = arith.constant dense<0.000000e+00> : vector<4x8xf32>
      %31 = vector.multi_reduction <add>, %30, %cst_21 [2] : vector<4x8x8xf32> to vector<4x8xf32>
      %c0_22 = arith.constant 0 : index
      %32 = memref.load %arg6[%c0_22] : memref<1xf32, #tpu.memory_space<smem>>
      %33 = vector.broadcast %32 : f32 to vector<4x8xf32>
      %34 = arith.addf %31, %33 : vector<4x8xf32>
      %35 = math.tanh %34 : vector<4x8xf32>
      %c0_23 = arith.constant 0 : index
      %c0_24 = arith.constant 0 : index
      %c0_25 = arith.constant 0 : index
      %c0_26 = arith.constant 0 : index
      %36 = vector.load %arg7[%c0_23, %c0_24, %c0_25, %c0_26] : memref<1x1x4x8xf32, #tpu.memory_space<vmem>>, vector<1x1x4x8xf32>
      %37 = vector.shape_cast %36 : vector<1x1x4x8xf32> to vector<4x8xf32>
      %38 = vector.shape_cast %35 : vector<4x8xf32> to vector<1x1x4x8xf32>
      tpu.vector_store %arg7[%c0_23, %c0_24, %c0_25, %c0_26], %38 {strides = array<i32>} : memref<1x1x4x8xf32, #tpu.memory_space<vmem>>, vector<1x1x4x8xf32>,
    } else {
    }
    "tpu.trace_start"() <{level = 10 : i32, message = "hqd,hkd->hqk"}> : () -> ()
    %cst = arith.constant dense<0.000000e+00> : vector<4x8x8xf32>
    %9 = tpu.matmul %1, %3, %cst {dimension_numbers = #tpu.dot_dimension_numbers<[2], [2], [1], [1], [0, 0, 0, 1, 1, 1], [0], [0]>} : vector<4x8x8xbf16>, vector<4x8x8xbf16>, vector<4x8x8xf32> -> vector<4x8x8xf32>
    "tpu.trace_stop"() : () -> ()
    %10 = vector.shape_cast %5 : vector<1x8xf32> to vector<1x1x8xf32>
    %11 = vector.broadcast %10 : vector<1x1x8xf32> to vector<4x8x8xf32>
    %12 = arith.addf %9, %11 : vector<4x8x8xf32>
    %cst_11 = arith.constant dense<0xFF800000> : vector<4x8xf32>
    %13 = vector.multi_reduction <maximumf>, %12, %cst_11 [2] : vector<4x8x8xf32> to vector<4x8xf32>
    %14 = vector.shape_cast %13 : vector<4x8xf32> to vector<4x8x1xf32>
    %15 = vector.broadcast %14 : vector<4x8x1xf32> to vector<4x8x8xf32>
    %16 = arith.subf %12, %15 : vector<4x8x8xf32>
    %17 = math.exp %16 : vector<4x8x8xf32>
    %cst_12 = arith.constant dense<0.000000e+00> : vector<4x8xf32>
    %18 = vector.multi_reduction <add>, %17, %cst_12 [2] : vector<4x8x8xf32> to vector<4x8xf32>
    %19 = vector.shape_cast %18 : vector<4x8xf32> to vector<4x8x1xf32>
    %20 = tpu.reciprocal %19 {approx = true} : vector<4x8x1xf32> -> vector<4x8x1xf32>
    %21 = vector.broadcast %20 : vector<4x8x1xf32> to vector<4x8x8xf32>
    %22 = arith.mulf %17, %21 : vector<4x8x8xf32>
    %c0_13 = arith.constant 0 : index
    %c0_14 = arith.constant 0 : index
    %c0_15 = arith.constant 0 : index
    %c0_16 = arith.constant 0 : index
    %23 = vector.load %arg8[%c0_13, %c0_14, %c0_15, %c0_16] : memref<1x4x8x8xf32, #tpu.memory_space<vmem>>, vector<1x4x8x8xf32>
    %24 = vector.shape_cast %23 : vector<1x4x8x8xf32> to vector<4x8x8xf32>
    %25 = vector.shape_cast %22 : vector<4x8x8xf32> to vector<1x4x8x8xf32>
    tpu.vector_store %arg8[%c0_13, %c0_14, %c0_15, %c0_16], %25 {strides = array<i32>} : memref<1x4x8x8xf32, #tpu.memory_space<vmem>>, vector<1x4x8x8xf32>,
    return
  }
  func.func @transform_0(%arg0: i32, %arg1: i32) -> (i32, i32, i32, i32) {
    %c0_i32 = arith.constant 0 : i32
    %c0_i32_0 = arith.constant 0 : i32
    %c0_i32_1 = arith.constant 0 : i32
    %c0_i32_2 = arith.constant 0 : i32
    return %arg0, %c0_i32, %c0_i32_0, %c0_i32_1 : i32, i32, i32, i32
  }
  func.func @transform_1(%arg0: i32, %arg1: i32) -> (i32, i32, i32, i32) {
    %c0_i32 = arith.constant 0 : i32
    %c0_i32_0 = arith.constant 0 : i32
    %c0_i32_1 = arith.constant 0 : i32
    return %arg0, %c0_i32, %arg1, %c0_i32_0 : i32, i32, i32, i32
  }
  func.func @transform_2(%arg0: i32, %arg1: i32) -> (i32, i32, i32, i32) {
    %c0_i32 = arith.constant 0 : i32
    %c0_i32_0 = arith.constant 0 : i32
    %c0_i32_1 = arith.constant 0 : i32
    %c0_i32_2 = arith.constant 0 : i32
    return %arg0, %c0_i32, %c0_i32_0, %c0_i32_1 : i32, i32, i32, i32
  }
  func.func @transform_3(%arg0: i32, %arg1: i32) -> (i32, i32, i32) {
    %c0_i32 = arith.constant 0 : i32
    %c0_i32_0 = arith.constant 0 : i32
    %c0_i32_1 = arith.constant 0 : i32
    return %arg0, %c0_i32, %c0_i32_0 : i32, i32, i32
  }
  func.func @transform_4(%arg0: i32, %arg1: i32) -> i32 {
    %c0_i32 = arith.constant 0 : i32
    %c0_i32_0 = arith.constant 0 : i32
    return %c0_i32 : i32
  }
  func.func @transform_5(%arg0: i32, %arg1: i32) -> (i32, i32, i32, i32) {
    %c0_i32 = arith.constant 0 : i32
    %c0_i32_0 = arith.constant 0 : i32
    %c0_i32_1 = arith.constant 0 : i32
    return %arg0, %arg1, %c0_i32, %c0_i32_0 : i32, i32, i32, i32
  }
  func.func @transform_6(%arg0: i32, %arg1: i32) -> (i32, i32, i32, i32) {
    %c0_i32 = arith.constant 0 : i32
    %c0_i32_0 = arith.constant 0 : i32
    %c0_i32_1 = arith.constant 0 : i32
    return %arg0, %c0_i32, %arg1, %c0_i32_0 : i32, i32, i32, i32
  }
}

</mosaic_0001>

<llo_original>
// kernel: tpu_custom_call.1
$region0: #{tpu_custom_call.1}
  #allocation0 [shape = 'u32[]', space=smem, size = 0x4, offset = 0x4, fixed_abs, tag = 'smem constant byte address 0x4 - core index']
  #allocation1 [shape = 'u32[72,128]{1,0:T(1,128)}', space=vmem, size = 0x9000, scoped, tag = 'internal scratch']
  #allocation2 [shape = 'f32[1]{0:T(128)S(6)}', space=smem, size = 0x200, scoped, tag = 'scoped memory for tpu_custom_call.1']
  %s0 = inlined_call_operand.hbm [shape: f32[2,4,1,8], index: 0, kind: input, shape index: {}]
  %s1 = inlined_call_operand.hbm [shape: bf16[2,4,8,8], index: 1, kind: input, shape index: {}]
  %s2 = inlined_call_operand.hbm [shape: bf16[2,4,8,8], index: 2, kind: input, shape index: {}]
  %s3 = inlined_call_operand.vmem [shape: f32[2,1,8], index: 3, kind: input, shape index: {}]
  %s4 = inlined_call_operand.<no memory space> [shape: f32[1], index: 4, kind: input, shape index: {}]
  %s5 = inlined_call_operand.hbm [shape: f32[2,1,4,8], index: 5, kind: output, shape index: {0}]
  %s6 = inlined_call_operand.hbm [shape: f32[2,4,8,8], index: 6, kind: output, shape index: {1}]
  %7 = xla_tuple %s5, %s6
  %s8 = sld [smem:[#allocation0]]
  $region77: #{tpu_custom_call.1} parent=0
    _
  %s10 = ssub.s32 1, %s8
  %s11 = scalar_select 0, %s10, %s8
  %12 = sst [smem:[#allocation2]] %s4
  $region1: #{tpu_custom_call.1} parent=0
    #allocation3 [shape = 'u8[4096]{0}', space=vmem, size = 0x1000, scoped, tag = 'input window, operand 0']
    #allocation4 [shape = 's32[2]{0}', space=sflag, size = 0x8, scoped, tag = 'scoped memory for tpu_custom_call.1']
    #allocation5 [shape = 's32[2]{0}', space=sflag, size = 0x8, scoped, tag = 'scoped memory for tpu_custom_call.1']
    #allocation6 [shape = 'u8[16384]{0}', space=vmem, size = 0x4000, scoped, tag = 'input window, operand 1']
    #allocation7 [shape = 's32[2]{0}', space=sflag, size = 0x8, scoped, tag = 'scoped memory for tpu_custom_call.1']
    #allocation8 [shape = 'u8[16384]{0}', space=vmem, size = 0x4000, scoped, tag = 'input window, operand 2']
    #allocation9 [shape = 'u8[4096]{0}', space=vmem, size = 0x1000, scoped, tag = 'output window, operand 0']
    #allocation10 [shape = 'u8[32768]{0}', space=vmem, size = 0x8000, scoped, tag = 'output window, operand 1']
    #allocation11 [shape = 's32[2]{0}', space=sflag, size = 0x8, scoped, tag = 'scoped memory for tpu_custom_call.1']
    %13 = vsyncpa [#allocation4], 0
    %s14 = scalar_lea.sflag [#allocation4], 1
    %15 = vsyncpa %s14, 0
    %16 = vsyncpa [#allocation7], 0
    %s17 = scalar_lea.sflag [#allocation7], 1
    %18 = vsyncpa %s17, 0
    %19 = vsyncpa [#allocation5], 0
    %s20 = scalar_lea.sflag [#allocation5], 1
    %21 = vsyncpa %s20, 0
    %22 = vsyncpa [#allocation11], 0
    %s23 = scalar_lea.sflag [#allocation11], 1
    %24 = vsyncpa %s23, 0
    loop: start=0, step=1, limit=4
    $region2: #{tpu_custom_call.1} parent=1 // loop_pre_header
      _
    $region3: #{tpu_custom_call.1} parent=1 // loop_header
      %s26 = sphi 0, %s30
      %p27 = scmp.ge.s32.totalorder %s26, 4
      %s33 = sphi 0, %s45
      %s34 = sphi 0, %s41
      %s35 = sphi 0, %s33
      %s36 = sphi 0, %s34
      %s37 = sphi 0, %s35
      %s38 = sphi 0, %s36
      %s48 = sphi 0, %s50
      %s51 = sphi 0, %s48
      %s52 = sphi 0, %s51
      %s68 = sphi 0, %s52
      %s76 = sphi 0, %s78
      %s79 = sphi 0, %s76
      %s80 = sphi 0, %s79
      %s96 = sphi 0, %s80
      %s102 = sphi 0, %s104
      %s105 = sphi 0, %s102
      %s106 = sphi 0, %s105
      %s122 = sphi 0, %s106
      %s128 = sphi 0, %s130
      %s131 = sphi 0, %s128
      %s132 = sphi 0, %s131
      %s148 = sphi 0, %s132
      %s152 = sphi 0, %s152
      %s154 = sphi 0, %s152
      %s155 = sphi 0, %s154
      %s169 = sphi 0, %s155
      %s177 = sphi 0, %s179
      %s180 = sphi 0, %s177
      %s181 = sphi 0, %s180
      %s197 = sphi 0, %s181
      %s205 = sphi 0, %s207
      %s208 = sphi 0, %s205
      %s209 = sphi 0, %s208
      %s225 = sphi 0, %s209
    $region4: #{tpu_custom_call.1} parent=1 // loop_header_branch
      %29 = sbr.rel (%p27) target = $region8
    $region5: #{tpu_custom_call.1} parent=1 // loop_body
      %s31 = ssub.s32 %s26, 1
      %s32 = ssub.s32 %s26, 2
      %s39 = sadd.s32 1, %s34
      %p40 = scmp.ge.s32.totalorder %s39, 1
      %s41 = scalar_select %p40, 0, %s39
      %s42 = sadd.s32 1, %s33
      %s43 = scalar_select %p40, %s42, %s33
      %p44 = scmp.ge.s32.totalorder %s43, 2
      %s45 = scalar_select %p44, 0, %s43
      %s46 = ssub.s32 %s33, %s45
      %p47 = scmp.eq.s32.totalorder %s46, 0
      %s49 = sadd.s32 %s48, 1
      %s50 = scalar_select %p47, %s48, %s49
      %p53 = pneg %p47
      %p54 = scmp.eq.s32.totalorder %s26, 1
      %p55 = por %p53, %p54
      %p56 = scmp.ne.s32.totalorder %s48, %s51
      %p57 = scmp.eq.s32.totalorder %s26, 0
      %p58 = por %p56, %p57
      %p59 = scmp.ne.s32.totalorder %s48, %s51
      %p60 = scmp.eq.s32.totalorder %s31, 1
      %p61 = por %p59, %p60
      %p62 = scmp.ne.s32.totalorder %s51, %s52
      %p63 = scmp.eq.s32.totalorder %s31, 0
      %p64 = por %p62, %p63
      %p65 = scmp.ne.s32.totalorder %s51, %s52
      %p66 = scmp.eq.s32.totalorder %s32, 1
      %p67 = por %p65, %p66
      %p69 = scmp.ne.s32.totalorder %s52, %s68
      %p70 = scmp.eq.s32.totalorder %s32, 0
      %p71 = por %p69, %p70
      %s72 = ssub.s32 %s33, %s45
      %s73 = ssub.s32 %s34, %s41
      %s74 = sor.u32 %s72, %s73
      %p75 = scmp.eq.s32.totalorder %s74, 0
      %s77 = sadd.s32 %s76, 1
      %s78 = scalar_select %p75, %s76, %s77
      %p81 = pneg %p75
      %p82 = scmp.eq.s32.totalorder %s26, 1
      %p83 = por %p81, %p82
      %p84 = scmp.ne.s32.totalorder %s76, %s79
      %p85 = scmp.eq.s32.totalorder %s26, 0
      %p86 = por %p84, %p85
      %p87 = scmp.ne.s32.totalorder %s76, %s79
      %p88 = scmp.eq.s32.totalorder %s31, 1
      %p89 = por %p87, %p88
      %p90 = scmp.ne.s32.totalorder %s79, %s80
      %p91 = scmp.eq.s32.totalorder %s31, 0
      %p92 = por %p90, %p91
      %p93 = scmp.ne.s32.totalorder %s79, %s80
      %p94 = scmp.eq.s32.totalorder %s32, 1
      %p95 = por %p93, %p94
      %p97 = scmp.ne.s32.totalorder %s80, %s96
      %p98 = scmp.eq.s32.totalorder %s32, 0
      %p99 = por %p97, %p98
      %s100 = ssub.s32 %s33, %s45
      %p101 = scmp.eq.s32.totalorder %s100, 0
      %s103 = sadd.s32 %s102, 1
      %s104 = scalar_select %p101, %s102, %s103
      %p107 = pneg %p101
      %p108 = scmp.eq.s32.totalorder %s26, 1
      %p109 = por %p107, %p108
      %p110 = scmp.ne.s32.totalorder %s102, %s105
      %p111 = scmp.eq.s32.totalorder %s26, 0
      %p112 = por %p110, %p111
      %p113 = scmp.ne.s32.totalorder %s102, %s105
      %p114 = scmp.eq.s32.totalorder %s31, 1
      %p115 = por %p113, %p114
      %p116 = scmp.ne.s32.totalorder %s105, %s106
      %p117 = scmp.eq.s32.totalorder %s31, 0
      %p118 = por %p116, %p117
      %p119 = scmp.ne.s32.totalorder %s105, %s106
      %p120 = scmp.eq.s32.totalorder %s32, 1
      %p121 = por %p119, %p120
      %p123 = scmp.ne.s32.totalorder %s106, %s122
      %p124 = scmp.eq.s32.totalorder %s32, 0
      %p125 = por %p123, %p124
      %s126 = ssub.s32 %s33, %s45
      %p127 = scmp.eq.s32.totalorder %s126, 0
      %s129 = sadd.s32 %s128, 1
      %s130 = scalar_select %p127, %s128, %s129
      %p133 = pneg %p127
      %p134 = scmp.eq.s32.totalorder %s26, 1
      %p135 = por %p133, %p134
      %p136 = scmp.ne.s32.totalorder %s128, %s131
      %p137 = scmp.eq.s32.totalorder %s26, 0
      %p138 = por %p136, %p137
      %p139 = scmp.ne.s32.totalorder %s128, %s131
      %p140 = scmp.eq.s32.totalorder %s31, 1
      %p141 = por %p139, %p140
      %p142 = scmp.ne.s32.totalorder %s131, %s132
      %p143 = scmp.eq.s32.totalorder %s31, 0
      %p144 = por %p142, %p143
      %p145 = scmp.ne.s32.totalorder %s131, %s132
      %p146 = scmp.eq.s32.totalorder %s32, 1
      %p147 = por %p145, %p146
      %p149 = scmp.ne.s32.totalorder %s132, %s148
      %p150 = scmp.eq.s32.totalorder %s32, 0
      %p151 = por %p149, %p150
      %s153 = sadd.s32 %s152, 1
      %p156 = scmp.eq.s32.totalorder %s26, 1
      %p157 = scmp.ne.s32.totalorder %s152, %s154
      %p158 = scmp.eq.s32.totalorder %s26, 0
      %p159 = por %p157, %p158
      %p160 = scmp.ne.s32.totalorder %s152, %s154
      %p161 = scmp.eq.s32.totalorder %s31, 1
      %p162 = por %p160, %p161
      %p163 = scmp.ne.s32.totalorder %s154, %s155
      %p164 = scmp.eq.s32.totalorder %s31, 0
      %p165 = por %p163, %p164
      %p166 = scmp.ne.s32.totalorder %s154, %s155
      %p167 = scmp.eq.s32.totalorder %s32, 1
      %p168 = por %p166, %p167
      %p170 = scmp.ne.s32.totalorder %s155, %s169
      %p171 = scmp.eq.s32.totalorder %s32, 0
      %p172 = por %p170, %p171
      %s173 = ssub.s32 %s33, %s45
      %s174 = ssub.s32 %s34, %s41
      %s175 = sor.u32 %s173, %s174
      %p176 = scmp.eq.s32.totalorder %s175, 0
      %s178 = sadd.s32 %s177, 1
      %s179 = scalar_select %p176, %s177, %s178
      %p182 = pneg %p176
      %p183 = scmp.eq.s32.totalorder %s26, 1
      %p184 = por %p182, %p183
      %p185 = scmp.ne.s32.totalorder %s177, %s180
      %p186 = scmp.eq.s32.totalorder %s26, 0
      %p187 = por %p185, %p186
      %p188 = scmp.ne.s32.totalorder %s177, %s180
      %p189 = scmp.eq.s32.totalorder %s31, 1
      %p190 = por %p188, %p189
      %p191 = scmp.ne.s32.totalorder %s180, %s181
      %p192 = scmp.eq.s32.totalorder %s31, 0
      %p193 = por %p191, %p192
      %p194 = scmp.ne.s32.totalorder %s180, %s181
      %p195 = scmp.eq.s32.totalorder %s32, 1
      %p196 = por %p194, %p195
      %p198 = scmp.ne.s32.totalorder %s181, %s197
      %p199 = scmp.eq.s32.totalorder %s32, 0
      %p200 = por %p198, %p199
      %s201 = ssub.s32 %s33, %s45
      %s202 = ssub.s32 %s34, %s41
      %s203 = sor.u32 %s201, %s202
      %p204 = scmp.eq.s32.totalorder %s203, 0
      %s206 = sadd.s32 %s205, 1
      %s207 = scalar_select %p204, %s205, %s206
      %p210 = pneg %p204
      %p211 = scmp.eq.s32.totalorder %s26, 1
      %p212 = por %p210, %p211
      %p213 = scmp.ne.s32.totalorder %s205, %s208
      %p214 = scmp.eq.s32.totalorder %s26, 0
      %p215 = por %p213, %p214
      %p216 = scmp.ne.s32.totalorder %s205, %s208
      %p217 = scmp.eq.s32.totalorder %s31, 1
      %p218 = por %p216, %p217
      %p219 = scmp.ne.s32.totalorder %s208, %s209
      %p220 = scmp.eq.s32.totalorder %s31, 0
      %p221 = por %p219, %p220
      %p222 = scmp.ne.s32.totalorder %s208, %s209
      %p223 = scmp.eq.s32.totalorder %s32, 1
      %p224 = por %p222, %p223
      %p226 = scmp.ne.s32.totalorder %s209, %s225
      %p227 = scmp.eq.s32.totalorder %s32, 0
      %p228 = por %p226, %p227
      %p229 = scmp.le.s32.totalorder 1, %s26
      %p230 = scmp.lt.s32.totalorder %s26, 3
      %p231 = pnand %p229, %p230
      %p232 = pneg %p231
      // Predicated region
      $region9: #{tpu_custom_call.1} parent=5 // pred_check
        _
      $region10: #{tpu_custom_call.1} parent=5 // pred_check_branch
        %234 = sbr.rel (%p231) target = $region12
      $region11: #{tpu_custom_call.1} parent=5 // pred_region
        %s235 = ssub.s32 %s26, 1
        // Predicated region
        $region13: #{tpu_custom_call.1} parent=11 // pred_check
          %p236 = pneg %p165
        $region14: #{tpu_custom_call.1} parent=11 // pred_check_branch
          %238 = sbr.rel (%p236) target = $region16
        $region15: #{tpu_custom_call.1} parent=11 // pred_region
          _
        $region16: #{tpu_custom_call.1} parent=11 // pred_fallthru
          _
      $region12: #{tpu_custom_call.1} parent=5 // pred_fallthru
        _
      %p239 = scmp.lt.s32.totalorder %s26, 2
      // Predicated region
      $region17: #{tpu_custom_call.1} parent=5 // pred_check
        %p240 = pneg %p239
      $region18: #{tpu_custom_call.1} parent=5 // pred_check_branch
        %242 = sbr.rel (%p240) target = $region20
      $region19: #{tpu_custom_call.1} parent=5 // pred_region
        // Predicated region
        $region21: #{tpu_custom_call.1} parent=19 // pred_check
          %p243 = pneg %p58
        $region22: #{tpu_custom_call.1} parent=19 // pred_check_branch
          %245 = sbr.rel (%p243) target = $region24
        $region23: #{tpu_custom_call.1} parent=19 // pred_region
          %s246 = sand.u32 %s48, 1
          %s247 = scalar_lea.sflag [#allocation4], %s246
          %s248 = sand.u32 %s48, 1
          %s249 = smul.addr %s248, 4
          %s250 = scalar_lea.vmem [#allocation3], %s249
          %252 = vsyncadd %s247, 0
          %s253 = smul.addr %s33, 4
          %s254 = scalar_lea.hbm %s0, %s253
          %s255 = sshll.u32 %s254, 4
          %s256 = int_to_ptr.hbm [resolvable:$true] %s255
          %s257 = sshll.u32 %s250, 4
          %s258 = int_to_ptr.vmem [resolvable:$true] %s257
          %263 = dma.hbm_to_vmem [thread:$0]  %s256, 64, %s258, %s247, 16, 16, 1
        $region24: #{tpu_custom_call.1} parent=19 // pred_fallthru
          _
        // Predicated region
        $region25: #{tpu_custom_call.1} parent=19 // pred_check
          %p264 = pneg %p86
        $region26: #{tpu_custom_call.1} parent=19 // pred_check_branch
          %266 = sbr.rel (%p264) target = $region28
        $region27: #{tpu_custom_call.1} parent=19 // pred_region
          %s267 = sand.u32 %s26, 1
          %s268 = scalar_lea.sflag [#allocation7], %s267
          %s269 = sand.u32 %s76, 1
          %s270 = smul.addr %s269, 16
          %s271 = scalar_lea.vmem [#allocation6], %s270
          %273 = vsyncadd %s268, 0
          %s274 = smul.addr %s33, 4
          %s275 = sadd.s32 %s34, %s274
          %s276 = smul.addr %s275, 4
          %s277 = scalar_lea.hbm %s1, %s276
          %s278 = sshll.u32 %s277, 4
          %s279 = int_to_ptr.hbm [resolvable:$true] %s278
          %s280 = sshll.u32 %s271, 4
          %s281 = int_to_ptr.vmem [resolvable:$true] %s280
          %286 = dma.hbm_to_vmem [thread:$0]  %s279, 256, %s281, %s268, 64, 64, 4
        $region28: #{tpu_custom_call.1} parent=19 // pred_fallthru
          _
        // Predicated region
        $region29: #{tpu_custom_call.1} parent=19 // pred_check
          %p287 = pneg %p112
        $region30: #{tpu_custom_call.1} parent=19 // pred_check_branch
          %289 = sbr.rel (%p287) target = $region32
        $region31: #{tpu_custom_call.1} parent=19 // pred_region
          %s290 = sand.u32 %s26, 1
          %s291 = scalar_lea.sflag [#allocation7], %s290
          %s292 = sand.u32 %s102, 1
          %s293 = smul.addr %s292, 16
          %s294 = scalar_lea.vmem [#allocation8], %s293
          %296 = vsyncadd %s291, 0
          %s297 = smul.addr %s33, 4
          %s298 = smul.addr %s297, 4
          %s299 = scalar_lea.hbm %s2, %s298
          %s300 = sshll.u32 %s299, 4
          %s301 = int_to_ptr.hbm [resolvable:$true] %s300
          %s302 = sshll.u32 %s294, 4
          %s303 = int_to_ptr.vmem [resolvable:$true] %s302
          %308 = dma.hbm_to_vmem [thread:$0]  %s301, 256, %s303, %s291, 64, 64, 4
        $region32: #{tpu_custom_call.1} parent=19 // pred_fallthru
          _
        // Predicated region
        $region33: #{tpu_custom_call.1} parent=19 // pred_check
          %p309 = pneg %p138
        $region34: #{tpu_custom_call.1} parent=19 // pred_check_branch
          %311 = sbr.rel (%p309) target = $region36
        $region35: #{tpu_custom_call.1} parent=19 // pred_region
          %p312 = scmp.lt.s32.totalorder %s33, 1
          %s313 = scalar_select %p312, %s33, 1
          %s314 = scalar_lea.vmem %s3, %s313
        $region36: #{tpu_custom_call.1} parent=19 // pred_fallthru
          _
      $region20: #{tpu_custom_call.1} parent=5 // pred_fallthru
        _
      %p315 = scmp.le.s32.totalorder 1, %s26
      %p316 = scmp.lt.s32.totalorder %s26, 3
      %p317 = pnand %p315, %p316
      %p318 = pneg %p317
      // Predicated region
      $region37: #{tpu_custom_call.1} parent=5 // pred_check
        _
      $region38: #{tpu_custom_call.1} parent=5 // pred_check_branch
        %320 = sbr.rel (%p317) target = $region40
      $region39: #{tpu_custom_call.1} parent=5 // pred_region
        %s321 = ssub.s32 %s26, 1
        %s322 = sand.u32 %s51, 1
        %s323 = scalar_lea.sflag [#allocation4], %s322
        %s324 = sand.u32 %s51, 1
        %s325 = smul.addr %s324, 4
        %s326 = scalar_lea.vmem [#allocation3], %s325
        // Predicated region
        $region41: #{tpu_custom_call.1} parent=39 // pred_check
          %p327 = pneg %p64
        $region42: #{tpu_custom_call.1} parent=39 // pred_check_branch
          %329 = sbr.rel (%p327) target = $region44
        $region43: #{tpu_custom_call.1} parent=39 // pred_region
          %331 = dma.done %s323, 64
        $region44: #{tpu_custom_call.1} parent=39 // pred_fallthru
          _
        %s332 = sand.u32 %s31, 1
        %s333 = scalar_lea.sflag [#allocation7], %s332
        %s334 = sand.u32 %s79, 1
        %s335 = smul.addr %s334, 16
        %s336 = scalar_lea.vmem [#allocation6], %s335
        // Predicated region
        $region45: #{tpu_custom_call.1} parent=39 // pred_check
          %p337 = pneg %p92
        $region46: #{tpu_custom_call.1} parent=39 // pred_check_branch
          %339 = sbr.rel (%p337) target = $region48
        $region47: #{tpu_custom_call.1} parent=39 // pred_region
          %341 = dma.done %s333, 256
        $region48: #{tpu_custom_call.1} parent=39 // pred_fallthru
          _
        %s342 = sand.u32 %s31, 1
        %s343 = scalar_lea.sflag [#allocation7], %s342
        %s344 = sand.u32 %s105, 1
        %s345 = smul.addr %s344, 16
        %s346 = scalar_lea.vmem [#allocation8], %s345
        // Predicated region
        $region49: #{tpu_custom_call.1} parent=39 // pred_check
          %p347 = pneg %p118
        $region50: #{tpu_custom_call.1} parent=39 // pred_check_branch
          %349 = sbr.rel (%p347) target = $region52
        $region51: #{tpu_custom_call.1} parent=39 // pred_region
          %351 = dma.done %s343, 256
        $region52: #{tpu_custom_call.1} parent=39 // pred_fallthru
          _
        %s352 = sand.u32 %s51, 1
        %s353 = scalar_lea.sflag [#allocation4], %s352
        %s354 = sand.u32 %s51, 1
        %s355 = smul.addr %s354, 4
        %s356 = scalar_lea.vmem [#allocation3], %s355
        %p357 = pneg %p64
        %p358 = pneg %p61
        %s359 = sand.u32 %s31, 1
        %s360 = scalar_lea.sflag [#allocation7], %s359
        %s361 = sand.u32 %s79, 1
        %s362 = smul.addr %s361, 16
        %s363 = scalar_lea.vmem [#allocation6], %s362
        %p364 = pneg %p92
        %p365 = pneg %p89
        %s366 = sand.u32 %s31, 1
        %s367 = scalar_lea.sflag [#allocation7], %s366
        %s368 = sand.u32 %s105, 1
        %s369 = smul.addr %s368, 16
        %s370 = scalar_lea.vmem [#allocation8], %s369
        %p371 = pneg %p118
        %p372 = pneg %p115
        %p373 = scmp.lt.s32.totalorder %s35, 1
        %s374 = scalar_select %p373, %s35, 1
        %s375 = scalar_lea.vmem %s3, %s374
        %p376 = pneg %p144
        %p377 = pneg %p141
        %p378 = pneg %p165
        %p379 = pneg %p162
        %p380 = pneg %p193
        %p381 = pneg %p190
        %s382 = sand.u32 %s180, 1
        %s383 = scalar_lea.sflag [#allocation5], %s382
        %s384 = sand.u32 %s180, 1
        %s385 = smul.addr %s384, 4
        %s386 = scalar_lea.vmem [#allocation9], %s385
        %p387 = pneg %p221
        %p388 = pneg %p218
        %s389 = sand.u32 %s208, 1
        %s390 = scalar_lea.sflag [#allocation11], %s389
        %s391 = sand.u32 %s208, 1
        %s392 = smul.addr %s391, 32
        %s393 = scalar_lea.vmem [#allocation10], %s392
        %p394 = scmp.lt.s32.totalorder %s35, 1
        %s395 = scalar_select %p394, %s35, 1
        %s396 = scalar_lea.vmem %s3, %s395
        %v398 = vld [vmem:[%s336] sm:$0xf]
        %v399 = vld [vmem:[%s336 + $0x4] sm:$0xf]
        %v400 = vld [vmem:[%s336 + $0x8] sm:$0xf]
        %v401 = vld [vmem:[%s336 + $0xc] sm:$0xf]
        %v402 = vld [vmem:[%s346] sm:$0xf]
        %v403 = vld [vmem:[%s346 + $0x4] sm:$0xf]
        %v404 = vld [vmem:[%s346 + $0x8] sm:$0xf]
        %v405 = vld [vmem:[%s346 + $0xc] sm:$0xf]
        %v406 = vld [vmem:[%s396] sm:$0x1]
        %p407 = scmp.eq.s32.totalorder %s36, 0
        // Predicated region
        $region53: #{tpu_custom_call.1} parent=39 // pred_check
          %p408 = pneg %p407
        $region54: #{tpu_custom_call.1} parent=39 // pred_check_branch
          %410 = sbr.rel (%p408) target = $region56
        $region55: #{tpu_custom_call.1} parent=39 // pred_region
          %v411 = vld [vmem:[%s326] sm:$0x1]
          %v412 = vld [vmem:[%s326 + $0x1] sm:$0x1]
          %v413 = vld [vmem:[%s326 + $0x2] sm:$0x1]
          %v414 = vld [vmem:[%s326 + $0x3] sm:$0x1]
          %v415 = vunpack.c.l.bf16 %v402
          %v416 = vunpack.c.l.bf16 %v403
          %v417 = vunpack.c.l.bf16 %v404
          %v418 = vunpack.c.l.bf16 %v405
          %v423 = vperm.slane %v411, 0
          %v424 = vperm.slane %v412, 0
          %v425 = vperm.slane %v413, 0
          %v426 = vperm.slane %v414, 0
          %v431 = vmul.f32 %v423, %v415
          %v432 = vmul.f32 %v424, %v416
          %v433 = vmul.f32 %v425, %v417
          %v434 = vmul.f32 %v426, %v418
          %vm435 = vcmask 64512
          %v436 = vsel %vm435, %v431, 0.0
          %437 = vadd.xlane.f32.xlu0 %v436
          %v438 = vpop.xlane.xlu0 %437
          %v439 = vsel %vm435, %v432, 0.0
          %440 = vadd.xlane.f32.xlu0 %v439
          %v441 = vpop.xlane.xlu0 %440
          %v442 = vsel %vm435, %v433, 0.0
          %443 = vadd.xlane.f32.xlu0 %v442
          %v444 = vpop.xlane.xlu0 %443
          %v445 = vsel %vm435, %v434, 0.0
          %446 = vadd.xlane.f32.xlu0 %v445
          %v447 = vpop.xlane.xlu0 %446
          %s448 = sld [smem:[#allocation2]]
          %v449 = vstv %s448
          %v450 = vadd.f32 %v438, %v449
          %v451 = vadd.f32 %v441, %v449
          %v452 = vadd.f32 %v444, %v449
          %v453 = vadd.f32 %v447, %v449
          %v454 = vtanh.pop %v450
          %v455 = vtanh.pop %v451
          %v456 = vtanh.pop %v452
          %v457 = vtanh.pop %v453
          %v462 = vlaneseq
          %v463 = vand.u32 %v462, 127
          %v464 = vperm.slane %v454, %v463
          %v465 = vperm.slane %v455, %v463
          %v466 = vperm.slane %v456, %v463
          %v467 = vperm.slane %v457, %v463
          %vm468 = vcmask 1041409
          %v469 = vsel %vm468, %v465, %v464
          %vm470 = vcmask 1042434
          %v471 = vsel %vm470, %v466, %v469
          %vm472 = vcmask 1043459
          %v473 = vsel %vm472, %v467, %v471
          %vm475 = vcmask 60416
          %476 = vst.msk [vmem:[%s386] sm:$0xf] %vm475, %v473
        $region56: #{tpu_custom_call.1} parent=39 // pred_fallthru
          _
        %v478 = vperm.slane %v406, 0
        %vm480 = vcmask 64512
        %v482 = vsel %vm480, %v398, 0
        %v485 = vsel %vm480, %v402, 0
        %487 = vmatpush.bf16.xpose.msra.mxu0 0
        %488 = vmatpush.bf16.xpose.msra.mxu0 0
        %489 = vmatpush.bf16.xpose.msra.mxu0 0
        %490 = vmatpush.bf16.xpose.msra.mxu0 0
        %491 = vmatpush.bf16.xpose.msra.mxu0 0
        %492 = vmatpush.bf16.xpose.msra.mxu0 0
        %493 = vmatpush.bf16.xpose.msra.mxu0 0
        %494 = vmatpush.bf16.xpose.msra.mxu0 %v485
        %495 = vmatmul.bf16.gmra.mxu0 %v482
        %v496 = vpop.f32.mrf.mxu0
        %v497 = vadd.f32 %v478, %v496
        %v498 = vpop.f32.mrf.mxu0
        %499 = vdwg.mxu0
        %v501 = vsel %vm480, %v399, 0
        %v504 = vsel %vm480, %v403, 0
        %506 = vmatpush.bf16.xpose.msra.mxu0 0
        %507 = vmatpush.bf16.xpose.msra.mxu0 0
        %508 = vmatpush.bf16.xpose.msra.mxu0 0
        %509 = vmatpush.bf16.xpose.msra.mxu0 0
        %510 = vmatpush.bf16.xpose.msra.mxu0 0
        %511 = vmatpush.bf16.xpose.msra.mxu0 0
        %512 = vmatpush.bf16.xpose.msra.mxu0 0
        %513 = vmatpush.bf16.xpose.msra.mxu0 %v504
        %514 = vmatmul.bf16.gmra.mxu0 %v501
        %v515 = vpop.f32.mrf.mxu0
        %v516 = vadd.f32 %v478, %v515
        %v517 = vpop.f32.mrf.mxu0
        %518 = vdwg.mxu0
        %v520 = vsel %vm480, %v400, 0
        %v523 = vsel %vm480, %v404, 0
        %525 = vmatpush.bf16.xpose.msra.mxu0 0
        %526 = vmatpush.bf16.xpose.msra.mxu0 0
        %527 = vmatpush.bf16.xpose.msra.mxu0 0
        %528 = vmatpush.bf16.xpose.msra.mxu0 0
        %529 = vmatpush.bf16.xpose.msra.mxu0 0
        %530 = vmatpush.bf16.xpose.msra.mxu0 0
        %531 = vmatpush.bf16.xpose.msra.mxu0 0
        %532 = vmatpush.bf16.xpose.msra.mxu0 %v523
        %533 = vmatmul.bf16.gmra.mxu0 %v520
        %v534 = vpop.f32.mrf.mxu0
        %v535 = vadd.f32 %v478, %v534
        %v536 = vpop.f32.mrf.mxu0
        %537 = vdwg.mxu0
        %v539 = vsel %vm480, %v401, 0
        %v542 = vsel %vm480, %v405, 0
        %544 = vmatpush.bf16.xpose.msra.mxu0 0
        %545 = vmatpush.bf16.xpose.msra.mxu0 0
        %546 = vmatpush.bf16.xpose.msra.mxu0 0
        %547 = vmatpush.bf16.xpose.msra.mxu0 0
        %548 = vmatpush.bf16.xpose.msra.mxu0 0
        %549 = vmatpush.bf16.xpose.msra.mxu0 0
        %550 = vmatpush.bf16.xpose.msra.mxu0 0
        %551 = vmatpush.bf16.xpose.msra.mxu0 %v542
        %552 = vmatmul.bf16.gmra.mxu0 %v539
        %v553 = vpop.f32.mrf.mxu0
        %v554 = vadd.f32 %v478, %v553
        %v555 = vpop.f32.mrf.mxu0
        %556 = vdwg.mxu0
        %v557 = vsel %vm480, %v497, -inf
        %558 = vmax.xlane.f32.xlu0 %v557
        %v559 = vpop.xlane.xlu0 %558
        %v560 = vsel %vm480, %v516, -inf
        %561 = vmax.xlane.f32.xlu0 %v560
        %v562 = vpop.xlane.xlu0 %561
        %v563 = vsel %vm480, %v535, -inf
        %564 = vmax.xlane.f32.xlu0 %v563
        %v565 = vpop.xlane.xlu0 %564
        %v566 = vsel %vm480, %v554, -inf
        %567 = vmax.xlane.f32.xlu0 %v566
        %v568 = vpop.xlane.xlu0 %567
        %v569 = vsub.f32 %v497, %v559
        %v570 = vsub.f32 %v516, %v562
        %v571 = vsub.f32 %v535, %v565
        %v572 = vsub.f32 %v554, %v568
        %v573 = vmul.f32 %v569, 1.442695
        %v574 = vpow.pop %v573
        %v575 = vmul.f32 %v570, 1.442695
        %v576 = vpow.pop %v575
        %v577 = vmul.f32 %v571, 1.442695
        %v578 = vpow.pop %v577
        %v579 = vmul.f32 %v572, 1.442695
        %v580 = vpow.pop %v579
        %v581 = vsel %vm480, %v574, 0.0
        %582 = vadd.xlane.f32.xlu0 %v581
        %v583 = vpop.xlane.xlu0 %582
        %v584 = vsel %vm480, %v576, 0.0
        %585 = vadd.xlane.f32.xlu0 %v584
        %v586 = vpop.xlane.xlu0 %585
        %v587 = vsel %vm480, %v578, 0.0
        %588 = vadd.xlane.f32.xlu0 %v587
        %v589 = vpop.xlane.xlu0 %588
        %v590 = vsel %vm480, %v580, 0.0
        %591 = vadd.xlane.f32.xlu0 %v590
        %v592 = vpop.xlane.xlu0 %591
        %v593 = vrcp.pop %v583
        %v594 = vrcp.pop %v586
        %v595 = vrcp.pop %v589
        %v596 = vrcp.pop %v592
        %v597 = vmul.f32 %v574, %v593
        %v598 = vmul.f32 %v576, %v594
        %v599 = vmul.f32 %v578, %v595
        %v600 = vmul.f32 %v580, %v596
        %601 = vst.msk [vmem:[%s393] sm:$0xff] %vm480, %v597
        %602 = vst.msk [vmem:[%s393 + $0x8] sm:$0xff] %vm480, %v598
        %603 = vst.msk [vmem:[%s393 + $0x10] sm:$0xff] %vm480, %v599
        %604 = vst.msk [vmem:[%s393 + $0x18] sm:$0xff] %vm480, %v600
        %s605 = sand.u32 %s180, 1
        %s606 = scalar_lea.sflag [#allocation5], %s605
        %s607 = sand.u32 %s180, 1
        %s608 = smul.addr %s607, 4
        %s609 = scalar_lea.vmem [#allocation9], %s608
        %s610 = sand.u32 %s208, 1
        %s611 = scalar_lea.sflag [#allocation11], %s610
        %s612 = sand.u32 %s208, 1
        %s613 = smul.addr %s612, 32
        %s614 = scalar_lea.vmem [#allocation10], %s613
        // Predicated region
        $region57: #{tpu_custom_call.1} parent=39 // pred_check
          %p615 = pneg %p190
        $region58: #{tpu_custom_call.1} parent=39 // pred_check_branch
          %617 = sbr.rel (%p615) target = $region60
        $region59: #{tpu_custom_call.1} parent=39 // pred_region
          %619 = vsyncadd %s606, 0
          %s620 = sadd.s32 %s36, %s35
          %s621 = smul.addr %s620, 4
          %s622 = scalar_lea.hbm %s5, %s621
          %s624 = sshll.u32 %s609, 4
          %s625 = int_to_ptr.vmem [resolvable:$true] %s624
          %s626 = sshll.u32 %s622, 4
          %s627 = int_to_ptr.hbm [resolvable:$true] %s626
          %629 = dma.vmem_to_hbm [thread:$0]  %s625, 64, %s627, %s606
        $region60: #{tpu_custom_call.1} parent=39 // pred_fallthru
          _
        // Predicated region
        $region61: #{tpu_custom_call.1} parent=39 // pred_check
          %p630 = pneg %p218
        $region62: #{tpu_custom_call.1} parent=39 // pred_check_branch
          %632 = sbr.rel (%p630) target = $region64
        $region63: #{tpu_custom_call.1} parent=39 // pred_region
          %634 = vsyncadd %s611, 0
          %s635 = smul.addr %s35, 4
          %s636 = sadd.s32 %s36, %s635
          %s637 = smul.addr %s636, 8
          %s638 = scalar_lea.hbm %s6, %s637
          %s639 = sshll.u32 %s614, 4
          %s640 = int_to_ptr.vmem [resolvable:$true] %s639
          %s641 = sshll.u32 %s638, 4
          %s642 = int_to_ptr.hbm [resolvable:$true] %s641
          %647 = dma.vmem_to_hbm [thread:$0]  %s640, 512, %s642, %s611, 128, 128, 8
        $region64: #{tpu_custom_call.1} parent=39 // pred_fallthru
          _
      $region40: #{tpu_custom_call.1} parent=5 // pred_fallthru
        _
      %p648 = scmp.le.s32.totalorder 2, %s26
      // Predicated region
      $region65: #{tpu_custom_call.1} parent=5 // pred_check
        %p649 = pneg %p648
      $region66: #{tpu_custom_call.1} parent=5 // pred_check_branch
        %651 = sbr.rel (%p649) target = $region68
      $region67: #{tpu_custom_call.1} parent=5 // pred_region
        %s652 = ssub.s32 %s26, 2
        // Predicated region
        $region69: #{tpu_custom_call.1} parent=67 // pred_check
          %p653 = pneg %p196
        $region70: #{tpu_custom_call.1} parent=67 // pred_check_branch
          %655 = sbr.rel (%p653) target = $region72
        $region71: #{tpu_custom_call.1} parent=67 // pred_region
          %s656 = sand.u32 %s181, 1
          %s657 = scalar_lea.sflag [#allocation5], %s656
          %s658 = sand.u32 %s181, 1
          %s659 = smul.addr %s658, 4
          %s660 = scalar_lea.vmem [#allocation9], %s659
          %662 = dma.done %s657, 64
        $region72: #{tpu_custom_call.1} parent=67 // pred_fallthru
          _
        // Predicated region
        $region73: #{tpu_custom_call.1} parent=67 // pred_check
          %p663 = pneg %p224
        $region74: #{tpu_custom_call.1} parent=67 // pred_check_branch
          %665 = sbr.rel (%p663) target = $region76
        $region75: #{tpu_custom_call.1} parent=67 // pred_region
          %s666 = sand.u32 %s209, 1
          %s667 = scalar_lea.sflag [#allocation11], %s666
          %s668 = sand.u32 %s209, 1
          %s669 = smul.addr %s668, 32
          %s670 = scalar_lea.vmem [#allocation10], %s669
          %672 = dma.done %s667, 512
        $region76: #{tpu_custom_call.1} parent=67 // pred_fallthru
          _
      $region68: #{tpu_custom_call.1} parent=5 // pred_fallthru
        _
    $region6: #{tpu_custom_call.1} parent=1 // loop_footer
      %s30 = sadd.s32 1, %s26
    $region7: #{tpu_custom_call.1} parent=1 // loop_footer_branch
      %25 = sbr.rel target = $region3
    $region8: #{tpu_custom_call.1} parent=1 // loop_exit
      _
    %673 = vsyncpa [#allocation4], 1
    %s674 = scalar_lea.sflag [#allocation4], 1
    %675 = vsyncpa %s674, 1
    %676 = vsyncpa [#allocation7], 1
    %s677 = scalar_lea.sflag [#allocation7], 1
    %678 = vsyncpa %s677, 1
    %679 = vsyncpa [#allocation5], 1
    %s680 = scalar_lea.sflag [#allocation5], 1
    %681 = vsyncpa %s680, 1
    %682 = vsyncpa [#allocation11], 1
    %s683 = scalar_lea.sflag [#allocation11], 1
    %684 = vsyncpa %s683, 1

</llo_original>
